<compile_context>
chip_gen: v5e
topology: v5e:2x2
jax: 0.10.0
libtpu: 0.0.40
codegen_flags: <defaults>
</compile_context>

<pallas_src>
import numpy as np
import jax
import jax.numpy as jnp
from jax import lax
from jax.experimental import pallas as pl
from jax.experimental.pallas import tpu as pltpu

OUT_PAD = 128          # lane-dense padded width for the final logits store
N_CLASSES = 10


# ------------------------------ fused kernel ---------------------------------
def _net_kernel(pt_ref, w1_ref, b1_ref, q_ref, b2_ref,
                wf1_ref, bf1_ref, wf2_ref, bf2_ref, wf3_ref, bf3_ref,
                out_ref):
    # conv1 (im2col matmul) + bias + ReLU:  (6,75) @ (75,S) -> (6,S)
    pt = pt_ref[0]                                                    # (75, S)
    h1 = jnp.dot(w1_ref[...], pt, preferred_element_type=jnp.float32)
    h1 = jnp.maximum(h1 + b1_ref[...], 0.0)                           # (6,S)+(6,1)

    # AdaptiveAvgPool(5,5) + conv2 folded into Q:
    #   h2[o] = b2[o] + sum_{c,s} h1[c,s] * Q[c,s,o]
    h2 = b2_ref[...]                                                  # (1, 16)
    for c in range(q_ref.shape[0]):                                   # static unroll (6)
        h2 = h2 + jnp.dot(h1[c:c + 1, :], q_ref[c],
                          preferred_element_type=jnp.float32)         # (1,S)@(S,16)
    h2 = jnp.maximum(h2, 0.0)                                         # (1, 16)

    # AdaptiveAvgPool(1x1->5x5) + flatten folded into fc1 (row-summed weight)
    h3 = jnp.maximum(jnp.dot(h2, wf1_ref[...],
                             preferred_element_type=jnp.float32) + bf1_ref[...], 0.0)
    h4 = jnp.maximum(jnp.dot(h3, wf2_ref[...],
                             preferred_element_type=jnp.float32) + bf2_ref[...], 0.0)
    out = jnp.dot(h4, wf3_ref[...],
                  preferred_element_type=jnp.float32) + bf3_ref[...]  # (1, 128)
    out_ref[0] = out.astype(out_ref.dtype)


# ------------------------------ glue helpers ---------------------------------
def adaptive_pool_matrix(in_size, out_size):
    """Row i averages input[start_i:end_i] with torch's adaptive-pool bin rule."""
    P = np.zeros((out_size, in_size), dtype=np.float32)
    for i in range(out_size):
        s = (i * in_size) // out_size
        e = -(-((i + 1) * in_size) // out_size)          # ceil
        P[i, s:e] = 1.0 / (e - s)
    return P


def _im2col_t(x, k):
    """NCHW x -> (B, C*k*k, Ho*Wo); feature order (c,kh,kw), spatial order (h,w)."""
    B, C, H, W = x.shape
    Ho, Wo = H - k + 1, W - k + 1
    cols = [x[:, :, kh:kh + Ho, kw:kw + Wo] for kh in range(k) for kw in range(k)]
    p = jnp.stack(cols, axis=2)                          # (B, C, k*k, Ho, Wo)
    return p.reshape(B, C * k * k, Ho * Wo)


def init_raw_params(key):
    """Deterministic PyTorch-style (uniform 1/sqrt(fan_in)) init, torch layouts."""
    ks = jax.random.split(key, 10)

    def uni(k, shape, fan_in):
        b = 1.0 / np.sqrt(fan_in)
        return jax.random.uniform(k, shape, jnp.float32, -b, b)

    return dict(
        conv1_w=uni(ks[0], (6, 3, 5, 5), 75),   conv1_b=uni(ks[1], (6,), 75),
        conv2_w=uni(ks[2], (16, 6, 5, 5), 150), conv2_b=uni(ks[3], (16,), 150),
        fc1_w=uni(ks[4], (120, 400), 400),      fc1_b=uni(ks[5], (120,), 400),
        fc2_w=uni(ks[6], (84, 120), 120),       fc2_b=uni(ks[7], (84,), 120),
        fc3_w=uni(ks[8], (10, 84), 84),         fc3_b=uni(ks[9], (10,), 84),
    )


def prepare_params(raw, Ho, Wo):
    """Fold the pools into neighbouring linear layers; lay weights out for the kernel."""
    f32 = jnp.float32
    ph = jnp.asarray(adaptive_pool_matrix(Ho, 5))                      # (5, Ho)
    pw = jnp.asarray(adaptive_pool_matrix(Wo, 5))                      # (5, Wo)

    w1 = raw["conv1_w"].reshape(6, 75).astype(f32)                     # (6, 75)
    b1 = raw["conv1_b"].reshape(6, 1).astype(f32)                      # (6, 1)

    # pool1 + conv2 fold: Q[c, h*Wo+w, o] = sum_{i,j} conv2_w[o,c,i,j] Ph[i,h] Pw[j,w]
    q = jnp.einsum("ocij,ih,jw->chwo", raw["conv2_w"].astype(f32), ph, pw)
    q = q.reshape(6, Ho * Wo, 16)                                      # (6, S, 16)
    b2 = raw["conv2_b"].reshape(1, 16).astype(f32)

    # pool2 (replicate 1x1->5x5) + flatten fold: sum the 25 fc1 columns per channel
    wf1 = raw["fc1_w"].reshape(120, 16, 25).sum(axis=2).T.astype(f32)  # (16, 120)
    bf1 = raw["fc1_b"].reshape(1, 120).astype(f32)
    wf2 = raw["fc2_w"].T.astype(f32)                                   # (120, 84)
    bf2 = raw["fc2_b"].reshape(1, 84).astype(f32)

    # fc3 zero-padded to 128 lanes -> lane-dense HBM store
    wf3 = jnp.zeros((84, OUT_PAD), f32).at[:, :N_CLASSES].set(raw["fc3_w"].T.astype(f32))
    bf3 = jnp.zeros((1, OUT_PAD), f32).at[:, :N_CLASSES].set(raw["fc3_b"].astype(f32))

    return dict(w1=w1, b1=b1, q=q, b2=b2, wf1=wf1, bf1=bf1,
                wf2=wf2, bf2=bf2, wf3=wf3, bf3=bf3)


# ------------------------------ forward pass ---------------------------------
def net_forward(x, params):
    B, C, H, W = x.shape
    Ho, Wo = H - 4, W - 4
    S = Ho * Wo
    patches_t = _im2col_t(x, 5)                          # (B, 75, S)

    def const_spec(arr):
        return pl.BlockSpec(arr.shape, lambda b, n=arr.ndim: (0,) * n)

    out = pl.pallas_call(
        _net_kernel,
        out_shape=jax.ShapeDtypeStruct((B, 1, OUT_PAD), jnp.float32),
        grid=(B,),
        in_specs=[
            pl.BlockSpec((1, C * 25, S), lambda b: (b, 0, 0)),   # per-batch patches
            const_spec(params["w1"]), const_spec(params["b1"]),
            const_spec(params["q"]), const_spec(params["b2"]),
            const_spec(params["wf1"]), const_spec(params["bf1"]),
            const_spec(params["wf2"]), const_spec(params["bf2"]),
            const_spec(params["wf3"]), const_spec(params["bf3"]),
        ],
        out_specs=pl.BlockSpec((1, 1, OUT_PAD), lambda b: (b, 0, 0)),
        compiler_params=pltpu.CompilerParams(dimension_semantics=("parallel",)),
    )(patches_t, params["w1"], params["b1"], params["q"], params["b2"],
      params["wf1"], params["bf1"], params["wf2"], params["bf2"],
      params["wf3"], params["bf3"])

    return out.reshape(B, OUT_PAD)[:, :N_CLASSES]


# ------------------------- pure-JAX reference (test) --------------------------
def _adaptive_pool_nchw(y, oh, ow):
    _, _, H, W = y.shape
    ph = jnp.asarray(adaptive_pool_matrix(H, oh))
    pw = jnp.asarray(adaptive_pool_matrix(W, ow))
    return jnp.einsum("ih,jw,bchw->bcij", ph, pw, y)


def ref_forward(x, raw):
    dn = ("NCHW", "OIHW", "NCHW")
    y = lax.conv_general_dilated(x, raw["conv1_w"], (1, 1), "VALID", dimension_numbers=dn)
    y = jnp.maximum(y + raw["conv1_b"][None, :, None, None], 0.0)
    y = _adaptive_pool_nchw(y, 5, 5)
    y = lax.conv_general_dilated(y, raw["conv2_w"], (1, 1), "VALID", dimension_numbers=dn)
    y = jnp.maximum(y + raw["conv2_b"][None, :, None, None], 0.0)
    y = _adaptive_pool_nchw(y, 5, 5)
    y = y.reshape(y.shape[0], -1)
    y = jnp.maximum(y @ raw["fc1_w"].T + raw["fc1_b"], 0.0)
    y = jnp.maximum(y @ raw["fc2_w"].T + raw["fc2_b"], 0.0)
    return y @ raw["fc3_w"].T + raw["fc3_b"]


if __name__ == "__main__":
    key = jax.random.PRNGKey(0)
    x = jax.random.normal(key, (2, 3, 16, 16), dtype=jnp.float32)     # (B, 3, H, W) NCHW
    raw = init_raw_params(jax.random.PRNGKey(42))
    params = prepare_params(raw, Ho=x.shape[2] - 4, Wo=x.shape[3] - 4)

    fwd = jax.jit(net_forward)
    out = jax.block_until_ready(fwd(x, params))

    assert out.shape == (2, N_CLASSES), out.shape
    assert bool(jnp.all(jnp.isfinite(out)))

    ref = ref_forward(x, raw)
    max_err = float(jnp.max(jnp.abs(out - ref)))
    assert bool(jnp.allclose(out, ref, rtol=2e-2, atol=2e-2)), max_err

    print("KERNEL_OK")
</pallas_src>

<mosaic_0001>
module attributes {stable_mosaic.version = 11 : i64} {
  func.func @_net_kernel(%arg0: i32, %arg1: memref<1x75x144xf32, #tpu.memory_space<vmem>>, %arg2: memref<6x75xf32, #tpu.memory_space<vmem>>, %arg3: memref<6x1xf32, #tpu.memory_space<vmem>>, %arg4: memref<6x144x16xf32, #tpu.memory_space<vmem>>, %arg5: memref<1x16xf32, #tpu.memory_space<vmem>>, %arg6: memref<16x120xf32, #tpu.memory_space<vmem>>, %arg7: memref<1x120xf32, #tpu.memory_space<vmem>>, %arg8: memref<120x84xf32, #tpu.memory_space<vmem>>, %arg9: memref<1x84xf32, #tpu.memory_space<vmem>>, %arg10: memref<84x128xf32, #tpu.memory_space<vmem>>, %arg11: memref<1x128xf32, #tpu.memory_space<vmem>>, %arg12: memref<1x1x128xf32, #tpu.memory_space<vmem>>) attributes {dimension_semantics = [#tpu.dimension_semantics<parallel>], iteration_bounds = array<i64: 2>, scalar_prefetch = 0 : i64, scratch_operands = 0 : i64, tpu.core_type = #tpu.core_type<tc>, window_params = [{transform_indices = @transform_0, window_bounds = array<i64: 1, 75, 144>}, {pipeline_mode = #tpu.pipeline_mode<synchronous>, transform_indices = @transform_1, window_bounds = array<i64: 6, 75>}, {pipeline_mode = #tpu.pipeline_mode<synchronous>, transform_indices = @transform_2, window_bounds = array<i64: 6, 1>}, {pipeline_mode = #tpu.pipeline_mode<synchronous>, transform_indices = @transform_3, window_bounds = array<i64: 6, 144, 16>}, {pipeline_mode = #tpu.pipeline_mode<synchronous>, transform_indices = @transform_4, window_bounds = array<i64: 1, 16>}, {pipeline_mode = #tpu.pipeline_mode<synchronous>, transform_indices = @transform_5, window_bounds = array<i64: 16, 120>}, {pipeline_mode = #tpu.pipeline_mode<synchronous>, transform_indices = @transform_6, window_bounds = array<i64: 1, 120>}, {pipeline_mode = #tpu.pipeline_mode<synchronous>, transform_indices = @transform_7, window_bounds = array<i64: 120, 84>}, {pipeline_mode = #tpu.pipeline_mode<synchronous>, transform_indices = @transform_8, window_bounds = array<i64: 1, 84>}, {pipeline_mode = #tpu.pipeline_mode<synchronous>, transform_indices = @transform_9, window_bounds = array<i64: 84, 128>}, {pipeline_mode = #tpu.pipeline_mode<synchronous>, transform_indices = @transform_10, window_bounds = array<i64: 1, 128>}, {transform_indices = @transform_11, window_bounds = array<i64: 1, 1, 128>}]} {
    %c0 = arith.constant 0 : index
    %c0_0 = arith.constant 0 : index
    %c0_1 = arith.constant 0 : index
    %0 = vector.load %arg1[%c0, %c0_0, %c0_1] : memref<1x75x144xf32, #tpu.memory_space<vmem>>, vector<1x75x144xf32>
    %1 = vector.shape_cast %0 : vector<1x75x144xf32> to vector<75x144xf32>
    %c0_2 = arith.constant 0 : index
    %c0_3 = arith.constant 0 : index
    %2 = vector.load %arg2[%c0_2, %c0_3] : memref<6x75xf32, #tpu.memory_space<vmem>>, vector<6x75xf32>
    %cst = arith.constant dense<0.000000e+00> : vector<6x144xf32>
    %3 = tpu.matmul %2, %1, %cst {dimension_numbers = #tpu.dot_dimension_numbers<[1], [0], [0], [1], [0, 0, 1, 1], [], []>} : vector<6x75xf32>, vector<75x144xf32>, vector<6x144xf32> -> vector<6x144xf32>
    %c0_4 = arith.constant 0 : index
    %c0_5 = arith.constant 0 : index
    %4 = vector.load %arg3[%c0_4, %c0_5] : memref<6x1xf32, #tpu.memory_space<vmem>>, vector<6x1xf32>
    %5 = vector.broadcast %4 : vector<6x1xf32> to vector<6x144xf32>
    %6 = arith.addf %3, %5 : vector<6x144xf32>
    %cst_6 = arith.constant 0.000000e+00 : f32
    %7 = vector.broadcast %cst_6 : f32 to vector<6x144xf32>
    %8 = arith.maximumf %6, %7 : vector<6x144xf32>
    %c0_7 = arith.constant 0 : index
    %c0_8 = arith.constant 0 : index
    %9 = vector.load %arg5[%c0_7, %c0_8] : memref<1x16xf32, #tpu.memory_space<vmem>>, vector<1x16xf32>
    %10 = vector.extract_strided_slice %8 {offsets = [0, 0], sizes = [1, 144], strides = [1, 1]} : vector<6x144xf32> to vector<1x144xf32>
    %c0_9 = arith.constant 0 : index
    %c0_10 = arith.constant 0 : index
    %c0_11 = arith.constant 0 : index
    %11 = vector.load %arg4[%c0_9, %c0_10, %c0_11] : memref<6x144x16xf32, #tpu.memory_space<vmem>>, vector<1x144x16xf32>
    %12 = vector.shape_cast %11 : vector<1x144x16xf32> to vector<144x16xf32>
    %cst_12 = arith.constant dense<0.000000e+00> : vector<1x16xf32>
    %13 = tpu.matmul %10, %12, %cst_12 {dimension_numbers = #tpu.dot_dimension_numbers<[1], [0], [0], [1], [0, 0, 1, 1], [], []>} : vector<1x144xf32>, vector<144x16xf32>, vector<1x16xf32> -> vector<1x16xf32>
    %14 = arith.addf %9, %13 : vector<1x16xf32>
    %15 = vector.extract_strided_slice %8 {offsets = [1, 0], sizes = [1, 144], strides = [1, 1]} : vector<6x144xf32> to vector<1x144xf32>
    %c1 = arith.constant 1 : index
    %c0_13 = arith.constant 0 : index
    %c0_14 = arith.constant 0 : index
    %16 = vector.load %arg4[%c1, %c0_13, %c0_14] : memref<6x144x16xf32, #tpu.memory_space<vmem>>, vector<1x144x16xf32>
    %17 = vector.shape_cast %16 : vector<1x144x16xf32> to vector<144x16xf32>
    %cst_15 = arith.constant dense<0.000000e+00> : vector<1x16xf32>
    %18 = tpu.matmul %15, %17, %cst_15 {dimension_numbers = #tpu.dot_dimension_numbers<[1], [0], [0], [1], [0, 0, 1, 1], [], []>} : vector<1x144xf32>, vector<144x16xf32>, vector<1x16xf32> -> vector<1x16xf32>
    %19 = arith.addf %14, %18 : vector<1x16xf32>
    %20 = vector.extract_strided_slice %8 {offsets = [2, 0], sizes = [1, 144], strides = [1, 1]} : vector<6x144xf32> to vector<1x144xf32>
    %c2 = arith.constant 2 : index
    %c0_16 = arith.constant 0 : index
    %c0_17 = arith.constant 0 : index
    %21 = vector.load %arg4[%c2, %c0_16, %c0_17] : memref<6x144x16xf32, #tpu.memory_space<vmem>>, vector<1x144x16xf32>
    %22 = vector.shape_cast %21 : vector<1x144x16xf32> to vector<144x16xf32>
    %cst_18 = arith.constant dense<0.000000e+00> : vector<1x16xf32>
    %23 = tpu.matmul %20, %22, %cst_18 {dimension_numbers = #tpu.dot_dimension_numbers<[1], [0], [0], [1], [0, 0, 1, 1], [], []>} : vector<1x144xf32>, vector<144x16xf32>, vector<1x16xf32> -> vector<1x16xf32>
    %24 = arith.addf %19, %23 : vector<1x16xf32>
    %25 = vector.extract_strided_slice %8 {offsets = [3, 0], sizes = [1, 144], strides = [1, 1]} : vector<6x144xf32> to vector<1x144xf32>
    %c3 = arith.constant 3 : index
    %c0_19 = arith.constant 0 : index
    %c0_20 = arith.constant 0 : index
    %26 = vector.load %arg4[%c3, %c0_19, %c0_20] : memref<6x144x16xf32, #tpu.memory_space<vmem>>, vector<1x144x16xf32>
    %27 = vector.shape_cast %26 : vector<1x144x16xf32> to vector<144x16xf32>
    %cst_21 = arith.constant dense<0.000000e+00> : vector<1x16xf32>
    %28 = tpu.matmul %25, %27, %cst_21 {dimension_numbers = #tpu.dot_dimension_numbers<[1], [0], [0], [1], [0, 0, 1, 1], [], []>} : vector<1x144xf32>, vector<144x16xf32>, vector<1x16xf32> -> vector<1x16xf32>
    %29 = arith.addf %24, %28 : vector<1x16xf32>
    %30 = vector.extract_strided_slice %8 {offsets = [4, 0], sizes = [1, 144], strides = [1, 1]} : vector<6x144xf32> to vector<1x144xf32>
    %c4 = arith.constant 4 : index
    %c0_22 = arith.constant 0 : index
    %c0_23 = arith.constant 0 : index
    %31 = vector.load %arg4[%c4, %c0_22, %c0_23] : memref<6x144x16xf32, #tpu.memory_space<vmem>>, vector<1x144x16xf32>
    %32 = vector.shape_cast %31 : vector<1x144x16xf32> to vector<144x16xf32>
    %cst_24 = arith.constant dense<0.000000e+00> : vector<1x16xf32>
    %33 = tpu.matmul %30, %32, %cst_24 {dimension_numbers = #tpu.dot_dimension_numbers<[1], [0], [0], [1], [0, 0, 1, 1], [], []>} : vector<1x144xf32>, vector<144x16xf32>, vector<1x16xf32> -> vector<1x16xf32>
    %34 = arith.addf %29, %33 : vector<1x16xf32>
    %35 = vector.extract_strided_slice %8 {offsets = [5, 0], sizes = [1, 144], strides = [1, 1]} : vector<6x144xf32> to vector<1x144xf32>
    %c5 = arith.constant 5 : index
    %c0_25 = arith.constant 0 : index
    %c0_26 = arith.constant 0 : index
    %36 = vector.load %arg4[%c5, %c0_25, %c0_26] : memref<6x144x16xf32, #tpu.memory_space<vmem>>, vector<1x144x16xf32>
    %37 = vector.shape_cast %36 : vector<1x144x16xf32> to vector<144x16xf32>
    %cst_27 = arith.constant dense<0.000000e+00> : vector<1x16xf32>
    %38 = tpu.matmul %35, %37, %cst_27 {dimension_numbers = #tpu.dot_dimension_numbers<[1], [0], [0], [1], [0, 0, 1, 1], [], []>} : vector<1x144xf32>, vector<144x16xf32>, vector<1x16xf32> -> vector<1x16xf32>
    %39 = arith.addf %34, %38 : vector<1x16xf32>
    %cst_28 = arith.constant 0.000000e+00 : f32
    %40 = vector.broadcast %cst_28 : f32 to vector<1x16xf32>
    %41 = arith.maximumf %39, %40 : vector<1x16xf32>
    %c0_29 = arith.constant 0 : index
    %c0_30 = arith.constant 0 : index
    %42 = vector.load %arg6[%c0_29, %c0_30] : memref<16x120xf32, #tpu.memory_space<vmem>>, vector<16x120xf32>
    %cst_31 = arith.constant dense<0.000000e+00> : vector<1x120xf32>
    %43 = tpu.matmul %41, %42, %cst_31 {dimension_numbers = #tpu.dot_dimension_numbers<[1], [0], [0], [1], [0, 0, 1, 1], [], []>} : vector<1x16xf32>, vector<16x120xf32>, vector<1x120xf32> -> vector<1x120xf32>
    %c0_32 = arith.constant 0 : index
    %c0_33 = arith.constant 0 : index
    %44 = vector.load %arg7[%c0_32, %c0_33] : memref<1x120xf32, #tpu.memory_space<vmem>>, vector<1x120xf32>
    %45 = arith.addf %43, %44 : vector<1x120xf32>
    %cst_34 = arith.constant 0.000000e+00 : f32
    %46 = vector.broadcast %cst_34 : f32 to vector<1x120xf32>
    %47 = arith.maximumf %45, %46 : vector<1x120xf32>
    %c0_35 = arith.constant 0 : index
    %c0_36 = arith.constant 0 : index
    %48 = vector.load %arg8[%c0_35, %c0_36] : memref<120x84xf32, #tpu.memory_space<vmem>>, vector<120x84xf32>
    %cst_37 = arith.constant dense<0.000000e+00> : vector<1x84xf32>
    %49 = tpu.matmul %47, %48, %cst_37 {dimension_numbers = #tpu.dot_dimension_numbers<[1], [0], [0], [1], [0, 0, 1, 1], [], []>} : vector<1x120xf32>, vector<120x84xf32>, vector<1x84xf32> -> vector<1x84xf32>
    %c0_38 = arith.constant 0 : index
    %c0_39 = arith.constant 0 : index
    %50 = vector.load %arg9[%c0_38, %c0_39] : memref<1x84xf32, #tpu.memory_space<vmem>>, vector<1x84xf32>
    %51 = arith.addf %49, %50 : vector<1x84xf32>
    %cst_40 = arith.constant 0.000000e+00 : f32
    %52 = vector.broadcast %cst_40 : f32 to vector<1x84xf32>
    %53 = arith.maximumf %51, %52 : vector<1x84xf32>
    %c0_41 = arith.constant 0 : index
    %c0_42 = arith.constant 0 : index
    %54 = vector.load %arg10[%c0_41, %c0_42] : memref<84x128xf32, #tpu.memory_space<vmem>>, vector<84x128xf32>
    %cst_43 = arith.constant dense<0.000000e+00> : vector<1x128xf32>
    %55 = tpu.matmul %53, %54, %cst_43 {dimension_numbers = #tpu.dot_dimension_numbers<[1], [0], [0], [1], [0, 0, 1, 1], [], []>} : vector<1x84xf32>, vector<84x128xf32>, vector<1x128xf32> -> vector<1x128xf32>
    %c0_44 = arith.constant 0 : index
    %c0_45 = arith.constant 0 : index
    %56 = vector.load %arg11[%c0_44, %c0_45] : memref<1x128xf32, #tpu.memory_space<vmem>>, vector<1x128xf32>
    %57 = arith.addf %55, %56 : vector<1x128xf32>
    %c0_46 = arith.constant 0 : index
    %c0_47 = arith.constant 0 : index
    %c0_48 = arith.constant 0 : index
    %58 = vector.load %arg12[%c0_46, %c0_47, %c0_48] : memref<1x1x128xf32, #tpu.memory_space<vmem>>, vector<1x1x128xf32>
    %59 = vector.shape_cast %58 : vector<1x1x128xf32> to vector<1x128xf32>
    %60 = vector.shape_cast %57 : vector<1x128xf32> to vector<1x1x128xf32>
    tpu.vector_store %arg12[%c0_46, %c0_47, %c0_48], %60 {strides = array<i32>} : memref<1x1x128xf32, #tpu.memory_space<vmem>>, vector<1x1x128xf32>,
    return
  }
  func.func @transform_0(%arg0: i32) -> (i32, i32, i32) {
    %c0_i32 = arith.constant 0 : i32
    %c0_i32_0 = arith.constant 0 : i32
    %c0_i32_1 = arith.constant 0 : i32
    return %arg0, %c0_i32, %c0_i32_0 : i32, i32, i32
  }
  func.func @transform_1(%arg0: i32) -> (i32, i32) {
    %c0_i32 = arith.constant 0 : i32
    %c0_i32_0 = arith.constant 0 : i32
    %c0_i32_1 = arith.constant 0 : i32
    return %c0_i32, %c0_i32_0 : i32, i32
  }
  func.func @transform_2(%arg0: i32) -> (i32, i32) {
    %c0_i32 = arith.constant 0 : i32
    %c0_i32_0 = arith.constant 0 : i32
    %c0_i32_1 = arith.constant 0 : i32
    return %c0_i32, %c0_i32_0 : i32, i32
  }
  func.func @transform_3(%arg0: i32) -> (i32, i32, i32) {
    %c0_i32 = arith.constant 0 : i32
    %c0_i32_0 = arith.constant 0 : i32
    %c0_i32_1 = arith.constant 0 : i32
    %c0_i32_2 = arith.constant 0 : i32
    return %c0_i32, %c0_i32_0, %c0_i32_1 : i32, i32, i32
  }
  func.func @transform_4(%arg0: i32) -> (i32, i32) {
    %c0_i32 = arith.constant 0 : i32
    %c0_i32_0 = arith.constant 0 : i32
    %c0_i32_1 = arith.constant 0 : i32
    return %c0_i32, %c0_i32_0 : i32, i32
  }
  func.func @transform_5(%arg0: i32) -> (i32, i32) {
    %c0_i32 = arith.constant 0 : i32
    %c0_i32_0 = arith.constant 0 : i32
    %c0_i32_1 = arith.constant 0 : i32
    return %c0_i32, %c0_i32_0 : i32, i32
  }
  func.func @transform_6(%arg0: i32) -> (i32, i32) {
    %c0_i32 = arith.constant 0 : i32
    %c0_i32_0 = arith.constant 0 : i32
    %c0_i32_1 = arith.constant 0 : i32
    return %c0_i32, %c0_i32_0 : i32, i32
  }
  func.func @transform_7(%arg0: i32) -> (i32, i32) {
    %c0_i32 = arith.constant 0 : i32
    %c0_i32_0 = arith.constant 0 : i32
    %c0_i32_1 = arith.constant 0 : i32
    return %c0_i32, %c0_i32_0 : i32, i32
  }
  func.func @transform_8(%arg0: i32) -> (i32, i32) {
    %c0_i32 = arith.constant 0 : i32
    %c0_i32_0 = arith.constant 0 : i32
    %c0_i32_1 = arith.constant 0 : i32
    return %c0_i32, %c0_i32_0 : i32, i32
  }
  func.func @transform_9(%arg0: i32) -> (i32, i32) {
    %c0_i32 = arith.constant 0 : i32
    %c0_i32_0 = arith.constant 0 : i32
    %c0_i32_1 = arith.constant 0 : i32
    return %c0_i32, %c0_i32_0 : i32, i32
  }
  func.func @transform_10(%arg0: i32) -> (i32, i32) {
    %c0_i32 = arith.constant 0 : i32
    %c0_i32_0 = arith.constant 0 : i32
    %c0_i32_1 = arith.constant 0 : i32
    return %c0_i32, %c0_i32_0 : i32, i32
  }
  func.func @transform_11(%arg0: i32) -> (i32, i32, i32) {
    %c0_i32 = arith.constant 0 : i32
    %c0_i32_0 = arith.constant 0 : i32
    %c0_i32_1 = arith.constant 0 : i32
    return %arg0, %c0_i32, %c0_i32_0 : i32, i32, i32
  }
}

</mosaic_0001>

<llo_original>
// kernel: net_forward.1
$region0: #{net_forward.1}
  #allocation0 [shape = 'u32[]', space=smem, size = 0x4, offset = 0x4, fixed_abs, tag = 'smem constant byte address 0x4 - core index']
  #allocation1 [shape = 'u32[72,128]{1,0:T(1,128)}', space=vmem, size = 0x9000, scoped, tag = 'internal scratch']
  %s0 = inlined_call_operand.vmem [shape: f32[2,75,144], index: 0, kind: input, shape index: {}]
  %s1 = inlined_call_operand.vmem [shape: f32[6,75], index: 1, kind: input, shape index: {}]
  %s2 = inlined_call_operand.vmem [shape: f32[6,1], index: 2, kind: input, shape index: {}]
  %s3 = inlined_call_operand.vmem [shape: f32[6,144,16], index: 3, kind: input, shape index: {}]
  %s4 = inlined_call_operand.vmem [shape: f32[1,16], index: 4, kind: input, shape index: {}]
  %s5 = inlined_call_operand.vmem [shape: f32[16,120], index: 5, kind: input, shape index: {}]
  %s6 = inlined_call_operand.vmem [shape: f32[1,120], index: 6, kind: input, shape index: {}]
  %s7 = inlined_call_operand.vmem [shape: f32[120,84], index: 7, kind: input, shape index: {}]
  %s8 = inlined_call_operand.vmem [shape: f32[1,84], index: 8, kind: input, shape index: {}]
  %s9 = inlined_call_operand.vmem [shape: f32[84,128], index: 9, kind: input, shape index: {}]
  %s10 = inlined_call_operand.vmem [shape: f32[1,128], index: 10, kind: input, shape index: {}]
  %s11 = inlined_call_operand.hbm [shape: f32[2,1,128], index: 11, kind: output, shape index: {}]
  %s12 = sld [smem:[#allocation0]]
  $region77: #{net_forward.1} parent=0
    _
  %s14 = ssub.s32 1, %s12
  %s15 = scalar_select 0, %s14, %s12
  $region1: #{net_forward.1} parent=0
    #allocation2 [shape = 'u8[1024]{0}', space=vmem, size = 0x400, scoped, tag = 'output window, operand 0']
    #allocation3 [shape = 's32[2]{0}', space=sflag, size = 0x8, scoped, tag = 'scoped memory for net_forward.1']
    %16 = vsyncpa [#allocation3], 0
    %s17 = scalar_lea.sflag [#allocation3], 1
    %18 = vsyncpa %s17, 0
    loop: start=0, step=1, limit=4
    $region2: #{net_forward.1} parent=1 // loop_pre_header
      _
    $region3: #{net_forward.1} parent=1 // loop_header
      %s20 = sphi 0, %s24
      %p21 = scmp.ge.s32.totalorder %s20, 4
      %s30 = sphi 0, %s32
      %s33 = sphi 0, %s30
      %s34 = sphi 0, %s33
      %s50 = sphi 0, %s34
      %s54 = sphi 0, %s54
      %s56 = sphi 0, %s54
      %s57 = sphi 0, %s56
      %s71 = sphi 0, %s57
      %s75 = sphi 0, %s75
      %s77 = sphi 0, %s75
      %s78 = sphi 0, %s77
      %s92 = sphi 0, %s78
      %s96 = sphi 0, %s96
      %s98 = sphi 0, %s96
      %s99 = sphi 0, %s98
      %s113 = sphi 0, %s99
      %s117 = sphi 0, %s117
      %s119 = sphi 0, %s117
      %s120 = sphi 0, %s119
      %s134 = sphi 0, %s120
      %s138 = sphi 0, %s138
      %s140 = sphi 0, %s138
      %s141 = sphi 0, %s140
      %s155 = sphi 0, %s141
      %s159 = sphi 0, %s159
      %s161 = sphi 0, %s159
      %s162 = sphi 0, %s161
      %s176 = sphi 0, %s162
      %s180 = sphi 0, %s180
      %s182 = sphi 0, %s180
      %s183 = sphi 0, %s182
      %s197 = sphi 0, %s183
      %s201 = sphi 0, %s201
      %s203 = sphi 0, %s201
      %s204 = sphi 0, %s203
      %s218 = sphi 0, %s204
      %s222 = sphi 0, %s222
      %s224 = sphi 0, %s222
      %s225 = sphi 0, %s224
      %s239 = sphi 0, %s225
      %s243 = sphi 0, %s243
      %s245 = sphi 0, %s243
      %s246 = sphi 0, %s245
      %s260 = sphi 0, %s246
      %s266 = sphi 0, %s268
      %s269 = sphi 0, %s266
      %s270 = sphi 0, %s269
      %s286 = sphi 0, %s270
    $region4: #{net_forward.1} parent=1 // loop_header_branch
      %23 = sbr.rel (%p21) target = $region8
    $region5: #{net_forward.1} parent=1 // loop_body
      %s25 = ssub.s32 %s20, 1
      %s26 = ssub.s32 %s20, 2
      %s27 = sadd.s32 %s20, 1
      %s28 = ssub.s32 %s20, %s27
      %p29 = scmp.eq.s32.totalorder %s28, 0
      %s31 = sadd.s32 %s30, 1
      %s32 = scalar_select %p29, %s30, %s31
      %p35 = pneg %p29
      %p36 = scmp.eq.s32.totalorder %s20, 1
      %p37 = por %p35, %p36
      %p38 = scmp.ne.s32.totalorder %s30, %s33
      %p39 = scmp.eq.s32.totalorder %s20, 0
      %p40 = por %p38, %p39
      %p41 = scmp.ne.s32.totalorder %s30, %s33
      %p42 = scmp.eq.s32.totalorder %s25, 1
      %p43 = por %p41, %p42
      %p44 = scmp.ne.s32.totalorder %s33, %s34
      %p45 = scmp.eq.s32.totalorder %s25, 0
      %p46 = por %p44, %p45
      %p47 = scmp.ne.s32.totalorder %s33, %s34
      %p48 = scmp.eq.s32.totalorder %s26, 1
      %p49 = por %p47, %p48
      %p51 = scmp.ne.s32.totalorder %s34, %s50
      %p52 = scmp.eq.s32.totalorder %s26, 0
      %p53 = por %p51, %p52
      %s55 = sadd.s32 %s54, 1
      %p58 = scmp.eq.s32.totalorder %s20, 1
      %p59 = scmp.ne.s32.totalorder %s54, %s56
      %p60 = scmp.eq.s32.totalorder %s20, 0
      %p61 = por %p59, %p60
      %p62 = scmp.ne.s32.totalorder %s54, %s56
      %p63 = scmp.eq.s32.totalorder %s25, 1
      %p64 = por %p62, %p63
      %p65 = scmp.ne.s32.totalorder %s56, %s57
      %p66 = scmp.eq.s32.totalorder %s25, 0
      %p67 = por %p65, %p66
      %p68 = scmp.ne.s32.totalorder %s56, %s57
      %p69 = scmp.eq.s32.totalorder %s26, 1
      %p70 = por %p68, %p69
      %p72 = scmp.ne.s32.totalorder %s57, %s71
      %p73 = scmp.eq.s32.totalorder %s26, 0
      %p74 = por %p72, %p73
      %s76 = sadd.s32 %s75, 1
      %p79 = scmp.eq.s32.totalorder %s20, 1
      %p80 = scmp.ne.s32.totalorder %s75, %s77
      %p81 = scmp.eq.s32.totalorder %s20, 0
      %p82 = por %p80, %p81
      %p83 = scmp.ne.s32.totalorder %s75, %s77
      %p84 = scmp.eq.s32.totalorder %s25, 1
      %p85 = por %p83, %p84
      %p86 = scmp.ne.s32.totalorder %s77, %s78
      %p87 = scmp.eq.s32.totalorder %s25, 0
      %p88 = por %p86, %p87
      %p89 = scmp.ne.s32.totalorder %s77, %s78
      %p90 = scmp.eq.s32.totalorder %s26, 1
      %p91 = por %p89, %p90
      %p93 = scmp.ne.s32.totalorder %s78, %s92
      %p94 = scmp.eq.s32.totalorder %s26, 0
      %p95 = por %p93, %p94
      %s97 = sadd.s32 %s96, 1
      %p100 = scmp.eq.s32.totalorder %s20, 1
      %p101 = scmp.ne.s32.totalorder %s96, %s98
      %p102 = scmp.eq.s32.totalorder %s20, 0
      %p103 = por %p101, %p102
      %p104 = scmp.ne.s32.totalorder %s96, %s98
      %p105 = scmp.eq.s32.totalorder %s25, 1
      %p106 = por %p104, %p105
      %p107 = scmp.ne.s32.totalorder %s98, %s99
      %p108 = scmp.eq.s32.totalorder %s25, 0
      %p109 = por %p107, %p108
      %p110 = scmp.ne.s32.totalorder %s98, %s99
      %p111 = scmp.eq.s32.totalorder %s26, 1
      %p112 = por %p110, %p111
      %p114 = scmp.ne.s32.totalorder %s99, %s113
      %p115 = scmp.eq.s32.totalorder %s26, 0
      %p116 = por %p114, %p115
      %s118 = sadd.s32 %s117, 1
      %p121 = scmp.eq.s32.totalorder %s20, 1
      %p122 = scmp.ne.s32.totalorder %s117, %s119
      %p123 = scmp.eq.s32.totalorder %s20, 0
      %p124 = por %p122, %p123
      %p125 = scmp.ne.s32.totalorder %s117, %s119
      %p126 = scmp.eq.s32.totalorder %s25, 1
      %p127 = por %p125, %p126
      %p128 = scmp.ne.s32.totalorder %s119, %s120
      %p129 = scmp.eq.s32.totalorder %s25, 0
      %p130 = por %p128, %p129
      %p131 = scmp.ne.s32.totalorder %s119, %s120
      %p132 = scmp.eq.s32.totalorder %s26, 1
      %p133 = por %p131, %p132
      %p135 = scmp.ne.s32.totalorder %s120, %s134
      %p136 = scmp.eq.s32.totalorder %s26, 0
      %p137 = por %p135, %p136
      %s139 = sadd.s32 %s138, 1
      %p142 = scmp.eq.s32.totalorder %s20, 1
      %p143 = scmp.ne.s32.totalorder %s138, %s140
      %p144 = scmp.eq.s32.totalorder %s20, 0
      %p145 = por %p143, %p144
      %p146 = scmp.ne.s32.totalorder %s138, %s140
      %p147 = scmp.eq.s32.totalorder %s25, 1
      %p148 = por %p146, %p147
      %p149 = scmp.ne.s32.totalorder %s140, %s141
      %p150 = scmp.eq.s32.totalorder %s25, 0
      %p151 = por %p149, %p150
      %p152 = scmp.ne.s32.totalorder %s140, %s141
      %p153 = scmp.eq.s32.totalorder %s26, 1
      %p154 = por %p152, %p153
      %p156 = scmp.ne.s32.totalorder %s141, %s155
      %p157 = scmp.eq.s32.totalorder %s26, 0
      %p158 = por %p156, %p157
      %s160 = sadd.s32 %s159, 1
      %p163 = scmp.eq.s32.totalorder %s20, 1
      %p164 = scmp.ne.s32.totalorder %s159, %s161
      %p165 = scmp.eq.s32.totalorder %s20, 0
      %p166 = por %p164, %p165
      %p167 = scmp.ne.s32.totalorder %s159, %s161
      %p168 = scmp.eq.s32.totalorder %s25, 1
      %p169 = por %p167, %p168
      %p170 = scmp.ne.s32.totalorder %s161, %s162
      %p171 = scmp.eq.s32.totalorder %s25, 0
      %p172 = por %p170, %p171
      %p173 = scmp.ne.s32.totalorder %s161, %s162
      %p174 = scmp.eq.s32.totalorder %s26, 1
      %p175 = por %p173, %p174
      %p177 = scmp.ne.s32.totalorder %s162, %s176
      %p178 = scmp.eq.s32.totalorder %s26, 0
      %p179 = por %p177, %p178
      %s181 = sadd.s32 %s180, 1
      %p184 = scmp.eq.s32.totalorder %s20, 1
      %p185 = scmp.ne.s32.totalorder %s180, %s182
      %p186 = scmp.eq.s32.totalorder %s20, 0
      %p187 = por %p185, %p186
      %p188 = scmp.ne.s32.totalorder %s180, %s182
      %p189 = scmp.eq.s32.totalorder %s25, 1
      %p190 = por %p188, %p189
      %p191 = scmp.ne.s32.totalorder %s182, %s183
      %p192 = scmp.eq.s32.totalorder %s25, 0
      %p193 = por %p191, %p192
      %p194 = scmp.ne.s32.totalorder %s182, %s183
      %p195 = scmp.eq.s32.totalorder %s26, 1
      %p196 = por %p194, %p195
      %p198 = scmp.ne.s32.totalorder %s183, %s197
      %p199 = scmp.eq.s32.totalorder %s26, 0
      %p200 = por %p198, %p199
      %s202 = sadd.s32 %s201, 1
      %p205 = scmp.eq.s32.totalorder %s20, 1
      %p206 = scmp.ne.s32.totalorder %s201, %s203
      %p207 = scmp.eq.s32.totalorder %s20, 0
      %p208 = por %p206, %p207
      %p209 = scmp.ne.s32.totalorder %s201, %s203
      %p210 = scmp.eq.s32.totalorder %s25, 1
      %p211 = por %p209, %p210
      %p212 = scmp.ne.s32.totalorder %s203, %s204
      %p213 = scmp.eq.s32.totalorder %s25, 0
      %p214 = por %p212, %p213
      %p215 = scmp.ne.s32.totalorder %s203, %s204
      %p216 = scmp.eq.s32.totalorder %s26, 1
      %p217 = por %p215, %p216
      %p219 = scmp.ne.s32.totalorder %s204, %s218
      %p220 = scmp.eq.s32.totalorder %s26, 0
      %p221 = por %p219, %p220
      %s223 = sadd.s32 %s222, 1
      %p226 = scmp.eq.s32.totalorder %s20, 1
      %p227 = scmp.ne.s32.totalorder %s222, %s224
      %p228 = scmp.eq.s32.totalorder %s20, 0
      %p229 = por %p227, %p228
      %p230 = scmp.ne.s32.totalorder %s222, %s224
      %p231 = scmp.eq.s32.totalorder %s25, 1
      %p232 = por %p230, %p231
      %p233 = scmp.ne.s32.totalorder %s224, %s225
      %p234 = scmp.eq.s32.totalorder %s25, 0
      %p235 = por %p233, %p234
      %p236 = scmp.ne.s32.totalorder %s224, %s225
      %p237 = scmp.eq.s32.totalorder %s26, 1
      %p238 = por %p236, %p237
      %p240 = scmp.ne.s32.totalorder %s225, %s239
      %p241 = scmp.eq.s32.totalorder %s26, 0
      %p242 = por %p240, %p241
      %s244 = sadd.s32 %s243, 1
      %p247 = scmp.eq.s32.totalorder %s20, 1
      %p248 = scmp.ne.s32.totalorder %s243, %s245
      %p249 = scmp.eq.s32.totalorder %s20, 0
      %p250 = por %p248, %p249
      %p251 = scmp.ne.s32.totalorder %s243, %s245
      %p252 = scmp.eq.s32.totalorder %s25, 1
      %p253 = por %p251, %p252
      %p254 = scmp.ne.s32.totalorder %s245, %s246
      %p255 = scmp.eq.s32.totalorder %s25, 0
      %p256 = por %p254, %p255
      %p257 = scmp.ne.s32.totalorder %s245, %s246
      %p258 = scmp.eq.s32.totalorder %s26, 1
      %p259 = por %p257, %p258
      %p261 = scmp.ne.s32.totalorder %s246, %s260
      %p262 = scmp.eq.s32.totalorder %s26, 0
      %p263 = por %p261, %p262
      %s264 = ssub.s32 %s20, %s27
      %p265 = scmp.eq.s32.totalorder %s264, 0
      %s267 = sadd.s32 %s266, 1
      %s268 = scalar_select %p265, %s266, %s267
      %p271 = pneg %p265
      %p272 = scmp.eq.s32.totalorder %s20, 1
      %p273 = por %p271, %p272
      %p274 = scmp.ne.s32.totalorder %s266, %s269
      %p275 = scmp.eq.s32.totalorder %s20, 0
      %p276 = por %p274, %p275
      %p277 = scmp.ne.s32.totalorder %s266, %s269
      %p278 = scmp.eq.s32.totalorder %s25, 1
      %p279 = por %p277, %p278
      %p280 = scmp.ne.s32.totalorder %s269, %s270
      %p281 = scmp.eq.s32.totalorder %s25, 0
      %p282 = por %p280, %p281
      %p283 = scmp.ne.s32.totalorder %s269, %s270
      %p284 = scmp.eq.s32.totalorder %s26, 1
      %p285 = por %p283, %p284
      %p287 = scmp.ne.s32.totalorder %s270, %s286
      %p288 = scmp.eq.s32.totalorder %s26, 0
      %p289 = por %p287, %p288
      %p290 = scmp.le.s32.totalorder 1, %s20
      %p291 = scmp.lt.s32.totalorder %s20, 3
      %p292 = pnand %p290, %p291
      %p293 = pneg %p292
      // Predicated region
      $region9: #{net_forward.1} parent=5 // pred_check
        _
      $region10: #{net_forward.1} parent=5 // pred_check_branch
        %295 = sbr.rel (%p292) target = $region12
      $region11: #{net_forward.1} parent=5 // pred_region
        %s296 = ssub.s32 %s20, 1
        // Predicated region
        $region13: #{net_forward.1} parent=11 // pred_check
          %p297 = pneg %p67
        $region14: #{net_forward.1} parent=11 // pred_check_branch
          %299 = sbr.rel (%p297) target = $region16
        $region15: #{net_forward.1} parent=11 // pred_region
          _
        $region16: #{net_forward.1} parent=11 // pred_fallthru
          _
        // Predicated region
        $region17: #{net_forward.1} parent=11 // pred_check
          %p300 = pneg %p88
        $region18: #{net_forward.1} parent=11 // pred_check_branch
          %302 = sbr.rel (%p300) target = $region20
        $region19: #{net_forward.1} parent=11 // pred_region
          _
        $region20: #{net_forward.1} parent=11 // pred_fallthru
          _
        // Predicated region
        $region21: #{net_forward.1} parent=11 // pred_check
          %p303 = pneg %p109
        $region22: #{net_forward.1} parent=11 // pred_check_branch
          %305 = sbr.rel (%p303) target = $region24
        $region23: #{net_forward.1} parent=11 // pred_region
          _
        $region24: #{net_forward.1} parent=11 // pred_fallthru
          _
        // Predicated region
        $region25: #{net_forward.1} parent=11 // pred_check
          %p306 = pneg %p130
        $region26: #{net_forward.1} parent=11 // pred_check_branch
          %308 = sbr.rel (%p306) target = $region28
        $region27: #{net_forward.1} parent=11 // pred_region
          _
        $region28: #{net_forward.1} parent=11 // pred_fallthru
          _
        // Predicated region
        $region29: #{net_forward.1} parent=11 // pred_check
          %p309 = pneg %p151
        $region30: #{net_forward.1} parent=11 // pred_check_branch
          %311 = sbr.rel (%p309) target = $region32
        $region31: #{net_forward.1} parent=11 // pred_region
          _
        $region32: #{net_forward.1} parent=11 // pred_fallthru
          _
        // Predicated region
        $region33: #{net_forward.1} parent=11 // pred_check
          %p312 = pneg %p172
        $region34: #{net_forward.1} parent=11 // pred_check_branch
          %314 = sbr.rel (%p312) target = $region36
        $region35: #{net_forward.1} parent=11 // pred_region
          _
        $region36: #{net_forward.1} parent=11 // pred_fallthru
          _
        // Predicated region
        $region37: #{net_forward.1} parent=11 // pred_check
          %p315 = pneg %p193
        $region38: #{net_forward.1} parent=11 // pred_check_branch
          %317 = sbr.rel (%p315) target = $region40
        $region39: #{net_forward.1} parent=11 // pred_region
          _
        $region40: #{net_forward.1} parent=11 // pred_fallthru
          _
        // Predicated region
        $region41: #{net_forward.1} parent=11 // pred_check
          %p318 = pneg %p214
        $region42: #{net_forward.1} parent=11 // pred_check_branch
          %320 = sbr.rel (%p318) target = $region44
        $region43: #{net_forward.1} parent=11 // pred_region
          _
        $region44: #{net_forward.1} parent=11 // pred_fallthru
          _
        // Predicated region
        $region45: #{net_forward.1} parent=11 // pred_check
          %p321 = pneg %p235
        $region46: #{net_forward.1} parent=11 // pred_check_branch
          %323 = sbr.rel (%p321) target = $region48
        $region47: #{net_forward.1} parent=11 // pred_region
          _
        $region48: #{net_forward.1} parent=11 // pred_fallthru
          _
        // Predicated region
        $region49: #{net_forward.1} parent=11 // pred_check
          %p324 = pneg %p256
        $region50: #{net_forward.1} parent=11 // pred_check_branch
          %326 = sbr.rel (%p324) target = $region52
        $region51: #{net_forward.1} parent=11 // pred_region
          _
        $region52: #{net_forward.1} parent=11 // pred_fallthru
          _
      $region12: #{net_forward.1} parent=5 // pred_fallthru
        _
      %p327 = scmp.lt.s32.totalorder %s20, 2
      // Predicated region
      $region53: #{net_forward.1} parent=5 // pred_check
        %p328 = pneg %p327
      $region54: #{net_forward.1} parent=5 // pred_check_branch
        %330 = sbr.rel (%p328) target = $region56
      $region55: #{net_forward.1} parent=5 // pred_region
        // Predicated region
        $region57: #{net_forward.1} parent=55 // pred_check
          %p331 = pneg %p40
        $region58: #{net_forward.1} parent=55 // pred_check_branch
          %333 = sbr.rel (%p331) target = $region60
        $region59: #{net_forward.1} parent=55 // pred_region
          %p334 = scmp.lt.s32.totalorder %s20, 1
          %s335 = scalar_select %p334, %s20, 1
          %s336 = smul.addr %s335, 20
          %s337 = smul.addr %s336, 8
          %s338 = scalar_lea.vmem %s0, %s337
        $region60: #{net_forward.1} parent=55 // pred_fallthru
          _
      $region56: #{net_forward.1} parent=5 // pred_fallthru
        _
      %p339 = scmp.le.s32.totalorder 1, %s20
      %p340 = scmp.lt.s32.totalorder %s20, 3
      %p341 = pnand %p339, %p340
      %p342 = pneg %p341
      // Predicated region
      $region61: #{net_forward.1} parent=5 // pred_check
        _
      $region62: #{net_forward.1} parent=5 // pred_check_branch
        %344 = sbr.rel (%p341) target = $region64
      $region63: #{net_forward.1} parent=5 // pred_region
        %s345 = ssub.s32 %s20, 1
        %p346 = scmp.lt.s32.totalorder %s25, 1
        %s347 = scalar_select %p346, %s25, 1
        %s348 = smul.addr %s347, 20
        %s349 = smul.addr %s348, 8
        %s350 = scalar_lea.vmem %s0, %s349
        %p351 = pneg %p46
        %p352 = pneg %p43
        %p353 = pneg %p67
        %p354 = pneg %p64
        %p355 = pneg %p88
        %p356 = pneg %p85
        %p357 = pneg %p109
        %p358 = pneg %p106
        %p359 = pneg %p130
        %p360 = pneg %p127
        %p361 = pneg %p151
        %p362 = pneg %p148
        %p363 = pneg %p172
        %p364 = pneg %p169
        %p365 = pneg %p193
        %p366 = pneg %p190
        %p367 = pneg %p214
        %p368 = pneg %p211
        %p369 = pneg %p235
        %p370 = pneg %p232
        %p371 = pneg %p256
        %p372 = pneg %p253
        %p373 = pneg %p282
        %p374 = pneg %p279
        %s375 = sand.u32 %s269, 1
        %s376 = scalar_lea.sflag [#allocation3], %s375
        %s377 = sand.u32 %s269, 1
        %s378 = scalar_lea.vmem [#allocation2], %s377
        %p379 = scmp.lt.s32.totalorder %s25, 1
        %s380 = scalar_select %p379, %s25, 1
        %s381 = smul.addr %s380, 20
        %s382 = smul.addr %s381, 8
        %s383 = scalar_lea.vmem %s0, %s382
        %v384 = vld [vmem:[%s383] sm:$0xff]
        %v385 = vld [vmem:[%s383 + $0x8] sm:$0xff]
        %v386 = vld [vmem:[%s383 + $0x10] sm:$0xff]
        %v387 = vld [vmem:[%s383 + $0x18] sm:$0xff]
        %v388 = vld [vmem:[%s383 + $0x20] sm:$0xff]
        %v389 = vld [vmem:[%s383 + $0x28] sm:$0xff]
        %v390 = vld [vmem:[%s383 + $0x30] sm:$0xff]
        %v391 = vld [vmem:[%s383 + $0x38] sm:$0xff]
        %v392 = vld [vmem:[%s383 + $0x40] sm:$0xff]
        %v393 = vld [vmem:[%s383 + $0x48] sm:$0xff]
        %v394 = vld [vmem:[%s383 + $0x50] sm:$0xff]
        %v395 = vld [vmem:[%s383 + $0x58] sm:$0xff]
        %v396 = vld [vmem:[%s383 + $0x60] sm:$0xff]
        %v397 = vld [vmem:[%s383 + $0x68] sm:$0xff]
        %v398 = vld [vmem:[%s383 + $0x70] sm:$0xff]
        %v399 = vld [vmem:[%s383 + $0x78] sm:$0xff]
        %v400 = vld [vmem:[%s383 + $0x80] sm:$0xff]
        %v401 = vld [vmem:[%s383 + $0x88] sm:$0xff]
        %v402 = vld [vmem:[%s383 + $0x90] sm:$0x7]
        %v403 = vld [vmem:[%s383 + $0x98] sm:$0x7]
        %v404 = vld [vmem:[%s1] sm:$0x3f]
        %v405 = vld [vmem:[%s2] sm:$0x3f]
        %407 = vset.pattern.permute.xlu0 0
        %408 = vperm.xlu0 %407, %v405
        %v409 = vpop.permute.xlu0 %408
        %vm411 = vcmask 613376
        %v413 = vsel %vm411, %v404, 0
        %vm415 = vcmask 1042432
        %v417 = vsel %vm415, %v402, 0
        %v420 = vsel %vm415, %v403, 0
        %422 = vmatpush.msra.mxu0 0.0
        %423 = vmatpush.msra.mxu0 0.0
        %424 = vmatpush.msra.mxu0 0.0
        %425 = vmatpush.msra.mxu0 0.0
        %426 = vmatpush.msra.mxu0 0.0
        %427 = vmatpush.msra.mxu0 0.0
        %428 = vmatpush.msra.mxu0 %v417
        %429 = vmatpush.msra.mxu0 %v400
        %430 = vmatpush.msra.mxu0 %v398
        %431 = vmatpush.msra.mxu0 %v396
        %432 = vmatpush.msra.mxu0 %v394
        %433 = vmatpush.msra.mxu0 %v392
        %434 = vmatpush.msra.mxu0 %v390
        %435 = vmatpush.msra.mxu0 %v388
        %436 = vmatpush.msra.mxu0 %v386
        %437 = vmatpush.msra.mxu0 %v384
        %438 = vmatmul.f32.gmra.mxu0 %v413
        %v439 = vpop.f32.mrf.mxu0
        %v440 = vadd.f32 %v409, %v439
        %441 = vdwg.mxu0
        %442 = vmatpush.msra.mxu0 0.0
        %443 = vmatpush.msra.mxu0 0.0
        %444 = vmatpush.msra.mxu0 0.0
        %445 = vmatpush.msra.mxu0 0.0
        %446 = vmatpush.msra.mxu0 0.0
        %447 = vmatpush.msra.mxu0 0.0
        %448 = vmatpush.msra.mxu0 %v420
        %449 = vmatpush.msra.mxu0 %v401
        %450 = vmatpush.msra.mxu0 %v399
        %451 = vmatpush.msra.mxu0 %v397
        %452 = vmatpush.msra.mxu0 %v395
        %453 = vmatpush.msra.mxu0 %v393
        %454 = vmatpush.msra.mxu0 %v391
        %455 = vmatpush.msra.mxu0 %v389
        %456 = vmatpush.msra.mxu0 %v387
        %457 = vmatpush.msra.mxu0 %v385
        %458 = vmatmul.f32.gmra.mxu0 %v413
        %v459 = vpop.f32.mrf.mxu0
        %v460 = vadd.f32 %v409, %v459
        %461 = vdwg.mxu0
        %v462 = vmax.f32 %v440, 0.0
        %v463 = vmax.f32 %v460, 0.0
        %v464 = vld [vmem:[%s4] sm:$0x1]
        %v465 = vld [vmem:[%s3] sm:$0xff]
        %v466 = vld [vmem:[%s3 + $0x8] sm:$0xff]
        %v467 = vld [vmem:[%s3 + $0x10] sm:$0xff]
        %v468 = vld [vmem:[%s3 + $0x18] sm:$0xff]
        %v469 = vld [vmem:[%s3 + $0x20] sm:$0xff]
        %v470 = vld [vmem:[%s3 + $0x28] sm:$0xff]
        %v471 = vld [vmem:[%s3 + $0x30] sm:$0xff]
        %v472 = vld [vmem:[%s3 + $0x38] sm:$0xff]
        %v473 = vld [vmem:[%s3 + $0x40] sm:$0xff]
        %v474 = vld [vmem:[%s3 + $0x48] sm:$0xff]
        %v475 = vld [vmem:[%s3 + $0x50] sm:$0xff]
        %v476 = vld [vmem:[%s3 + $0x58] sm:$0xff]
        %v477 = vld [vmem:[%s3 + $0x60] sm:$0xff]
        %v478 = vld [vmem:[%s3 + $0x68] sm:$0xff]
        %v479 = vld [vmem:[%s3 + $0x70] sm:$0xff]
        %v480 = vld [vmem:[%s3 + $0x78] sm:$0xff]
        %v481 = vld [vmem:[%s3 + $0x80] sm:$0xff]
        %v482 = vld [vmem:[%s3 + $0x88] sm:$0xff]
        %vm483 = vcmask 130048
        %v485 = vsel %vm483, %v463, 0
        %487 = vmatpush.msra.mxu0 %v480
        %488 = vmatpush.msra.mxu0 %v479
        %489 = vmatpush.msra.mxu0 %v478
        %490 = vmatpush.msra.mxu0 %v477
        %491 = vmatpush.msra.mxu0 %v476
        %492 = vmatpush.msra.mxu0 %v475
        %493 = vmatpush.msra.mxu0 %v474
        %494 = vmatpush.msra.mxu0 %v473
        %495 = vmatpush.msra.mxu0 %v472
        %496 = vmatpush.msra.mxu0 %v471
        %497 = vmatpush.msra.mxu0 %v470
        %498 = vmatpush.msra.mxu0 %v469
        %499 = vmatpush.msra.mxu0 %v468
        %500 = vmatpush.msra.mxu0 %v467
        %501 = vmatpush.msra.mxu0 %v466
        %502 = vmatpush.msra.mxu0 %v465
        %503 = vmatmul.f32.gmra.mxu0 %v462
        %v504 = vpop.f32.mrf.mxu0
        %v505 = vadd.f32 0.0, %v504
        %506 = vdwg.mxu0
        %507 = vmatpush.msra.mxu0 0.0
        %508 = vmatpush.msra.mxu0 0.0
        %509 = vmatpush.msra.mxu0 0.0
        %510 = vmatpush.msra.mxu0 0.0
        %511 = vmatpush.msra.mxu0 0.0
        %512 = vmatpush.msra.mxu0 0.0
        %513 = vmatpush.msra.mxu0 0.0
        %514 = vmatpush.msra.mxu0 0.0
        %515 = vmatpush.msra.mxu0 0.0
        %516 = vmatpush.msra.mxu0 0.0
        %517 = vmatpush.msra.mxu0 0.0
        %518 = vmatpush.msra.mxu0 0.0
        %519 = vmatpush.msra.mxu0 0.0
        %520 = vmatpush.msra.mxu0 0.0
        %521 = vmatpush.msra.mxu0 %v482
        %522 = vmatpush.msra.mxu0 %v481
        %523 = vmatmul.f32.gmra.mxu0 %v485
        %v524 = vpop.f32.mrf.mxu0
        %v525 = vadd.f32 %v505, %v524
        %526 = vdwg.mxu0
        %v527 = vadd.f32 %v464, %v525
        %s528 = scalar_lea.vmem %s3, 144
        %v529 = vld [vmem:[%s528] sm:$0xff]
        %v530 = vld [vmem:[%s528 + $0x8] sm:$0xff]
        %v531 = vld [vmem:[%s528 + $0x10] sm:$0xff]
        %v532 = vld [vmem:[%s528 + $0x18] sm:$0xff]
        %v533 = vld [vmem:[%s528 + $0x20] sm:$0xff]
        %v534 = vld [vmem:[%s528 + $0x28] sm:$0xff]
        %v535 = vld [vmem:[%s528 + $0x30] sm:$0xff]
        %v536 = vld [vmem:[%s528 + $0x38] sm:$0xff]
        %v537 = vld [vmem:[%s528 + $0x40] sm:$0xff]
        %v538 = vld [vmem:[%s528 + $0x48] sm:$0xff]
        %v539 = vld [vmem:[%s528 + $0x50] sm:$0xff]
        %v540 = vld [vmem:[%s528 + $0x58] sm:$0xff]
        %v541 = vld [vmem:[%s528 + $0x60] sm:$0xff]
        %v542 = vld [vmem:[%s528 + $0x68] sm:$0xff]
        %v543 = vld [vmem:[%s528 + $0x70] sm:$0xff]
        %v544 = vld [vmem:[%s528 + $0x78] sm:$0xff]
        %v545 = vld [vmem:[%s528 + $0x80] sm:$0xff]
        %v546 = vld [vmem:[%s528 + $0x88] sm:$0xff]
        %v548 = vrot.slane %v462, 1
        %v549 = vrot.slane %v463, 1
        %v551 = vsel %vm483, %v549, 0
        %553 = vmatpush.msra.mxu0 %v544
        %554 = vmatpush.msra.mxu0 %v543
        %555 = vmatpush.msra.mxu0 %v542
        %556 = vmatpush.msra.mxu0 %v541
        %557 = vmatpush.msra.mxu0 %v540
        %558 = vmatpush.msra.mxu0 %v539
        %559 = vmatpush.msra.mxu0 %v538
        %560 = vmatpush.msra.mxu0 %v537
        %561 = vmatpush.msra.mxu0 %v536
        %562 = vmatpush.msra.mxu0 %v535
        %563 = vmatpush.msra.mxu0 %v534
        %564 = vmatpush.msra.mxu0 %v533
        %565 = vmatpush.msra.mxu0 %v532
        %566 = vmatpush.msra.mxu0 %v531
        %567 = vmatpush.msra.mxu0 %v530
        %568 = vmatpush.msra.mxu0 %v529
        %569 = vmatmul.f32.gmra.mxu0 %v548
        %v570 = vpop.f32.mrf.mxu0
        %v571 = vadd.f32 0.0, %v570
        %572 = vdwg.mxu0
        %573 = vmatpush.msra.mxu0 0.0
        %574 = vmatpush.msra.mxu0 0.0
        %575 = vmatpush.msra.mxu0 0.0
        %576 = vmatpush.msra.mxu0 0.0
        %577 = vmatpush.msra.mxu0 0.0
        %578 = vmatpush.msra.mxu0 0.0
        %579 = vmatpush.msra.mxu0 0.0
        %580 = vmatpush.msra.mxu0 0.0
        %581 = vmatpush.msra.mxu0 0.0
        %582 = vmatpush.msra.mxu0 0.0
        %583 = vmatpush.msra.mxu0 0.0
        %584 = vmatpush.msra.mxu0 0.0
        %585 = vmatpush.msra.mxu0 0.0
        %586 = vmatpush.msra.mxu0 0.0
        %587 = vmatpush.msra.mxu0 %v546
        %588 = vmatpush.msra.mxu0 %v545
        %589 = vmatmul.f32.gmra.mxu0 %v551
        %v590 = vpop.f32.mrf.mxu0
        %v591 = vadd.f32 %v571, %v590
        %592 = vdwg.mxu0
        %v593 = vadd.f32 %v527, %v591
        %s594 = scalar_lea.vmem %s3, 288
        %v595 = vld [vmem:[%s594] sm:$0xff]
        %v596 = vld [vmem:[%s594 + $0x8] sm:$0xff]
        %v597 = vld [vmem:[%s594 + $0x10] sm:$0xff]
        %v598 = vld [vmem:[%s594 + $0x18] sm:$0xff]
        %v599 = vld [vmem:[%s594 + $0x20] sm:$0xff]
        %v600 = vld [vmem:[%s594 + $0x28] sm:$0xff]
        %v601 = vld [vmem:[%s594 + $0x30] sm:$0xff]
        %v602 = vld [vmem:[%s594 + $0x38] sm:$0xff]
        %v603 = vld [vmem:[%s594 + $0x40] sm:$0xff]
        %v604 = vld [vmem:[%s594 + $0x48] sm:$0xff]
        %v605 = vld [vmem:[%s594 + $0x50] sm:$0xff]
        %v606 = vld [vmem:[%s594 + $0x58] sm:$0xff]
        %v607 = vld [vmem:[%s594 + $0x60] sm:$0xff]
        %v608 = vld [vmem:[%s594 + $0x68] sm:$0xff]
        %v609 = vld [vmem:[%s594 + $0x70] sm:$0xff]
        %v610 = vld [vmem:[%s594 + $0x78] sm:$0xff]
        %v611 = vld [vmem:[%s594 + $0x80] sm:$0xff]
        %v612 = vld [vmem:[%s594 + $0x88] sm:$0xff]
        %v613 = vrot.slane %v462, 2
        %v614 = vrot.slane %v463, 2
        %v616 = vsel %vm483, %v614, 0
        %618 = vmatpush.msra.mxu0 %v610
        %619 = vmatpush.msra.mxu0 %v609
        %620 = vmatpush.msra.mxu0 %v608
        %621 = vmatpush.msra.mxu0 %v607
        %622 = vmatpush.msra.mxu0 %v606
        %623 = vmatpush.msra.mxu0 %v605
        %624 = vmatpush.msra.mxu0 %v604
        %625 = vmatpush.msra.mxu0 %v603
        %626 = vmatpush.msra.mxu0 %v602
        %627 = vmatpush.msra.mxu0 %v601
        %628 = vmatpush.msra.mxu0 %v600
        %629 = vmatpush.msra.mxu0 %v599
        %630 = vmatpush.msra.mxu0 %v598
        %631 = vmatpush.msra.mxu0 %v597
        %632 = vmatpush.msra.mxu0 %v596
        %633 = vmatpush.msra.mxu0 %v595
        %634 = vmatmul.f32.gmra.mxu0 %v613
        %v635 = vpop.f32.mrf.mxu0
        %v636 = vadd.f32 0.0, %v635
        %637 = vdwg.mxu0
        %638 = vmatpush.msra.mxu0 0.0
        %639 = vmatpush.msra.mxu0 0.0
        %640 = vmatpush.msra.mxu0 0.0
        %641 = vmatpush.msra.mxu0 0.0
        %642 = vmatpush.msra.mxu0 0.0
        %643 = vmatpush.msra.mxu0 0.0
        %644 = vmatpush.msra.mxu0 0.0
        %645 = vmatpush.msra.mxu0 0.0
        %646 = vmatpush.msra.mxu0 0.0
        %647 = vmatpush.msra.mxu0 0.0
        %648 = vmatpush.msra.mxu0 0.0
        %649 = vmatpush.msra.mxu0 0.0
        %650 = vmatpush.msra.mxu0 0.0
        %651 = vmatpush.msra.mxu0 0.0
        %652 = vmatpush.msra.mxu0 %v612
        %653 = vmatpush.msra.mxu0 %v611
        %654 = vmatmul.f32.gmra.mxu0 %v616
        %v655 = vpop.f32.mrf.mxu0
        %v656 = vadd.f32 %v636, %v655
        %657 = vdwg.mxu0
        %v658 = vadd.f32 %v593, %v656
        %s659 = scalar_lea.vmem %s3, 432
        %v660 = vld [vmem:[%s659] sm:$0xff]
        %v661 = vld [vmem:[%s659 + $0x8] sm:$0xff]
        %v662 = vld [vmem:[%s659 + $0x10] sm:$0xff]
        %v663 = vld [vmem:[%s659 + $0x18] sm:$0xff]
        %v664 = vld [vmem:[%s659 + $0x20] sm:$0xff]
        %v665 = vld [vmem:[%s659 + $0x28] sm:$0xff]
        %v666 = vld [vmem:[%s659 + $0x30] sm:$0xff]
        %v667 = vld [vmem:[%s659 + $0x38] sm:$0xff]
        %v668 = vld [vmem:[%s659 + $0x40] sm:$0xff]
        %v669 = vld [vmem:[%s659 + $0x48] sm:$0xff]
        %v670 = vld [vmem:[%s659 + $0x50] sm:$0xff]
        %v671 = vld [vmem:[%s659 + $0x58] sm:$0xff]
        %v672 = vld [vmem:[%s659 + $0x60] sm:$0xff]
        %v673 = vld [vmem:[%s659 + $0x68] sm:$0xff]
        %v674 = vld [vmem:[%s659 + $0x70] sm:$0xff]
        %v675 = vld [vmem:[%s659 + $0x78] sm:$0xff]
        %v676 = vld [vmem:[%s659 + $0x80] sm:$0xff]
        %v677 = vld [vmem:[%s659 + $0x88] sm:$0xff]
        %v678 = vrot.slane %v462, 3
        %v679 = vrot.slane %v463, 3
        %v681 = vsel %vm483, %v679, 0
        %683 = vmatpush.msra.mxu0 %v675
        %684 = vmatpush.msra.mxu0 %v674
        %685 = vmatpush.msra.mxu0 %v673
        %686 = vmatpush.msra.mxu0 %v672
        %687 = vmatpush.msra.mxu0 %v671
        %688 = vmatpush.msra.mxu0 %v670
        %689 = vmatpush.msra.mxu0 %v669
        %690 = vmatpush.msra.mxu0 %v668
        %691 = vmatpush.msra.mxu0 %v667
        %692 = vmatpush.msra.mxu0 %v666
        %693 = vmatpush.msra.mxu0 %v665
        %694 = vmatpush.msra.mxu0 %v664
        %695 = vmatpush.msra.mxu0 %v663
        %696 = vmatpush.msra.mxu0 %v662
        %697 = vmatpush.msra.mxu0 %v661
        %698 = vmatpush.msra.mxu0 %v660
        %699 = vmatmul.f32.gmra.mxu0 %v678
        %v700 = vpop.f32.mrf.mxu0
        %v701 = vadd.f32 0.0, %v700
        %702 = vdwg.mxu0
        %703 = vmatpush.msra.mxu0 0.0
        %704 = vmatpush.msra.mxu0 0.0
        %705 = vmatpush.msra.mxu0 0.0
        %706 = vmatpush.msra.mxu0 0.0
        %707 = vmatpush.msra.mxu0 0.0
        %708 = vmatpush.msra.mxu0 0.0
        %709 = vmatpush.msra.mxu0 0.0
        %710 = vmatpush.msra.mxu0 0.0
        %711 = vmatpush.msra.mxu0 0.0
        %712 = vmatpush.msra.mxu0 0.0
        %713 = vmatpush.msra.mxu0 0.0
        %714 = vmatpush.msra.mxu0 0.0
        %715 = vmatpush.msra.mxu0 0.0
        %716 = vmatpush.msra.mxu0 0.0
        %717 = vmatpush.msra.mxu0 %v677
        %718 = vmatpush.msra.mxu0 %v676
        %719 = vmatmul.f32.gmra.mxu0 %v681
        %v720 = vpop.f32.mrf.mxu0
        %v721 = vadd.f32 %v701, %v720
        %722 = vdwg.mxu0
        %v723 = vadd.f32 %v658, %v721
        %s724 = scalar_lea.vmem %s3, 576
        %v725 = vld [vmem:[%s724] sm:$0xff]
        %v726 = vld [vmem:[%s724 + $0x8] sm:$0xff]
        %v727 = vld [vmem:[%s724 + $0x10] sm:$0xff]
        %v728 = vld [vmem:[%s724 + $0x18] sm:$0xff]
        %v729 = vld [vmem:[%s724 + $0x20] sm:$0xff]
        %v730 = vld [vmem:[%s724 + $0x28] sm:$0xff]
        %v731 = vld [vmem:[%s724 + $0x30] sm:$0xff]
        %v732 = vld [vmem:[%s724 + $0x38] sm:$0xff]
        %v733 = vld [vmem:[%s724 + $0x40] sm:$0xff]
        %v734 = vld [vmem:[%s724 + $0x48] sm:$0xff]
        %v735 = vld [vmem:[%s724 + $0x50] sm:$0xff]
        %v736 = vld [vmem:[%s724 + $0x58] sm:$0xff]
        %v737 = vld [vmem:[%s724 + $0x60] sm:$0xff]
        %v738 = vld [vmem:[%s724 + $0x68] sm:$0xff]
        %v739 = vld [vmem:[%s724 + $0x70] sm:$0xff]
        %v740 = vld [vmem:[%s724 + $0x78] sm:$0xff]
        %v741 = vld [vmem:[%s724 + $0x80] sm:$0xff]
        %v742 = vld [vmem:[%s724 + $0x88] sm:$0xff]
        %v743 = vrot.slane %v462, 4
        %v744 = vrot.slane %v463, 4
        %v746 = vsel %vm483, %v744, 0
        %748 = vmatpush.msra.mxu0 %v740
        %749 = vmatpush.msra.mxu0 %v739
        %750 = vmatpush.msra.mxu0 %v738
        %751 = vmatpush.msra.mxu0 %v737
        %752 = vmatpush.msra.mxu0 %v736
        %753 = vmatpush.msra.mxu0 %v735
        %754 = vmatpush.msra.mxu0 %v734
        %755 = vmatpush.msra.mxu0 %v733
        %756 = vmatpush.msra.mxu0 %v732
        %757 = vmatpush.msra.mxu0 %v731
        %758 = vmatpush.msra.mxu0 %v730
        %759 = vmatpush.msra.mxu0 %v729
        %760 = vmatpush.msra.mxu0 %v728
        %761 = vmatpush.msra.mxu0 %v727
        %762 = vmatpush.msra.mxu0 %v726
        %763 = vmatpush.msra.mxu0 %v725
        %764 = vmatmul.f32.gmra.mxu0 %v743
        %v765 = vpop.f32.mrf.mxu0
        %v766 = vadd.f32 0.0, %v765
        %767 = vdwg.mxu0
        %768 = vmatpush.msra.mxu0 0.0
        %769 = vmatpush.msra.mxu0 0.0
        %770 = vmatpush.msra.mxu0 0.0
        %771 = vmatpush.msra.mxu0 0.0
        %772 = vmatpush.msra.mxu0 0.0
        %773 = vmatpush.msra.mxu0 0.0
        %774 = vmatpush.msra.mxu0 0.0
        %775 = vmatpush.msra.mxu0 0.0
        %776 = vmatpush.msra.mxu0 0.0
        %777 = vmatpush.msra.mxu0 0.0
        %778 = vmatpush.msra.mxu0 0.0
        %779 = vmatpush.msra.mxu0 0.0
        %780 = vmatpush.msra.mxu0 0.0
        %781 = vmatpush.msra.mxu0 0.0
        %782 = vmatpush.msra.mxu0 %v742
        %783 = vmatpush.msra.mxu0 %v741
        %784 = vmatmul.f32.gmra.mxu0 %v746
        %v785 = vpop.f32.mrf.mxu0
        %v786 = vadd.f32 %v766, %v785
        %787 = vdwg.mxu0
        %v788 = vadd.f32 %v723, %v786
        %s789 = scalar_lea.vmem %s3, 720
        %v790 = vld [vmem:[%s789] sm:$0xff]
        %v791 = vld [vmem:[%s789 + $0x8] sm:$0xff]
        %v792 = vld [vmem:[%s789 + $0x10] sm:$0xff]
        %v793 = vld [vmem:[%s789 + $0x18] sm:$0xff]
        %v794 = vld [vmem:[%s789 + $0x20] sm:$0xff]
        %v795 = vld [vmem:[%s789 + $0x28] sm:$0xff]
        %v796 = vld [vmem:[%s789 + $0x30] sm:$0xff]
        %v797 = vld [vmem:[%s789 + $0x38] sm:$0xff]
        %v798 = vld [vmem:[%s789 + $0x40] sm:$0xff]
        %v799 = vld [vmem:[%s789 + $0x48] sm:$0xff]
        %v800 = vld [vmem:[%s789 + $0x50] sm:$0xff]
        %v801 = vld [vmem:[%s789 + $0x58] sm:$0xff]
        %v802 = vld [vmem:[%s789 + $0x60] sm:$0xff]
        %v803 = vld [vmem:[%s789 + $0x68] sm:$0xff]
        %v804 = vld [vmem:[%s789 + $0x70] sm:$0xff]
        %v805 = vld [vmem:[%s789 + $0x78] sm:$0xff]
        %v806 = vld [vmem:[%s789 + $0x80] sm:$0xff]
        %v807 = vld [vmem:[%s789 + $0x88] sm:$0xff]
        %v808 = vrot.slane %v462, 5
        %v809 = vrot.slane %v463, 5
        %v811 = vsel %vm483, %v809, 0
        %813 = vmatpush.msra.mxu0 %v805
        %814 = vmatpush.msra.mxu0 %v804
        %815 = vmatpush.msra.mxu0 %v803
        %816 = vmatpush.msra.mxu0 %v802
        %817 = vmatpush.msra.mxu0 %v801
        %818 = vmatpush.msra.mxu0 %v800
        %819 = vmatpush.msra.mxu0 %v799
        %820 = vmatpush.msra.mxu0 %v798
        %821 = vmatpush.msra.mxu0 %v797
        %822 = vmatpush.msra.mxu0 %v796
        %823 = vmatpush.msra.mxu0 %v795
        %824 = vmatpush.msra.mxu0 %v794
        %825 = vmatpush.msra.mxu0 %v793
        %826 = vmatpush.msra.mxu0 %v792
        %827 = vmatpush.msra.mxu0 %v791
        %828 = vmatpush.msra.mxu0 %v790
        %829 = vmatmul.f32.gmra.mxu0 %v808
        %v830 = vpop.f32.mrf.mxu0
        %v831 = vadd.f32 0.0, %v830
        %832 = vdwg.mxu0
        %833 = vmatpush.msra.mxu0 0.0
        %834 = vmatpush.msra.mxu0 0.0
        %835 = vmatpush.msra.mxu0 0.0
        %836 = vmatpush.msra.mxu0 0.0
        %837 = vmatpush.msra.mxu0 0.0
        %838 = vmatpush.msra.mxu0 0.0
        %839 = vmatpush.msra.mxu0 0.0
        %840 = vmatpush.msra.mxu0 0.0
        %841 = vmatpush.msra.mxu0 0.0
        %842 = vmatpush.msra.mxu0 0.0
        %843 = vmatpush.msra.mxu0 0.0
        %844 = vmatpush.msra.mxu0 0.0
        %845 = vmatpush.msra.mxu0 0.0
        %846 = vmatpush.msra.mxu0 0.0
        %847 = vmatpush.msra.mxu0 %v807
        %848 = vmatpush.msra.mxu0 %v806
        %849 = vmatmul.f32.gmra.mxu0 %v811
        %v850 = vpop.f32.mrf.mxu0
        %v851 = vadd.f32 %v831, %v850
        %852 = vdwg.mxu0
        %v853 = vadd.f32 %v788, %v851
        %v854 = vmax.f32 %v853, 0.0
        %v855 = vld [vmem:[%s5] sm:$0xff]
        %v856 = vld [vmem:[%s5 + $0x8] sm:$0xff]
        %v857 = vld [vmem:[%s6] sm:$0x1]
        %v859 = vsel %vm483, %v854, 0
        %861 = vmatpush.msra.mxu0 0.0
        %862 = vmatpush.msra.mxu0 0.0
        %863 = vmatpush.msra.mxu0 0.0
        %864 = vmatpush.msra.mxu0 0.0
        %865 = vmatpush.msra.mxu0 0.0
        %866 = vmatpush.msra.mxu0 0.0
        %867 = vmatpush.msra.mxu0 0.0
        %868 = vmatpush.msra.mxu0 0.0
        %869 = vmatpush.msra.mxu0 0.0
        %870 = vmatpush.msra.mxu0 0.0
        %871 = vmatpush.msra.mxu0 0.0
        %872 = vmatpush.msra.mxu0 0.0
        %873 = vmatpush.msra.mxu0 0.0
        %874 = vmatpush.msra.mxu0 0.0
        %875 = vmatpush.msra.mxu0 %v856
        %876 = vmatpush.msra.mxu0 %v855
        %877 = vmatmul.f32.gmra.mxu0 %v859
        %v878 = vpop.f32.mrf.mxu0
        %v879 = vadd.f32 %v857, %v878
        %880 = vdwg.mxu0
        %v881 = vmax.f32 %v879, 0.0
        %v882 = vld [vmem:[%s7] sm:$0xff]
        %v883 = vld [vmem:[%s7 + $0x8] sm:$0xff]
        %v884 = vld [vmem:[%s7 + $0x10] sm:$0xff]
        %v885 = vld [vmem:[%s7 + $0x18] sm:$0xff]
        %v886 = vld [vmem:[%s7 + $0x20] sm:$0xff]
        %v887 = vld [vmem:[%s7 + $0x28] sm:$0xff]
        %v888 = vld [vmem:[%s7 + $0x30] sm:$0xff]
        %v889 = vld [vmem:[%s7 + $0x38] sm:$0xff]
        %v890 = vld [vmem:[%s7 + $0x40] sm:$0xff]
        %v891 = vld [vmem:[%s7 + $0x48] sm:$0xff]
        %v892 = vld [vmem:[%s7 + $0x50] sm:$0xff]
        %v893 = vld [vmem:[%s7 + $0x58] sm:$0xff]
        %v894 = vld [vmem:[%s7 + $0x60] sm:$0xff]
        %v895 = vld [vmem:[%s7 + $0x68] sm:$0xff]
        %v896 = vld [vmem:[%s7 + $0x70] sm:$0xff]
        %v897 = vld [vmem:[%s8] sm:$0x1]
        %vm898 = vcmask 982016
        %v900 = vsel %vm898, %v881, 0
        %902 = vmatpush.msra.mxu0 0.0
        %903 = vmatpush.msra.mxu0 %v896
        %904 = vmatpush.msra.mxu0 %v895
        %905 = vmatpush.msra.mxu0 %v894
        %906 = vmatpush.msra.mxu0 %v893
        %907 = vmatpush.msra.mxu0 %v892
        %908 = vmatpush.msra.mxu0 %v891
        %909 = vmatpush.msra.mxu0 %v890
        %910 = vmatpush.msra.mxu0 %v889
        %911 = vmatpush.msra.mxu0 %v888
        %912 = vmatpush.msra.mxu0 %v887
        %913 = vmatpush.msra.mxu0 %v886
        %914 = vmatpush.msra.mxu0 %v885
        %915 = vmatpush.msra.mxu0 %v884
        %916 = vmatpush.msra.mxu0 %v883
        %917 = vmatpush.msra.mxu0 %v882
        %918 = vmatmul.f32.gmra.mxu0 %v900
        %v919 = vpop.f32.mrf.mxu0
        %v920 = vadd.f32 %v897, %v919
        %921 = vdwg.mxu0
        %v922 = vmax.f32 %v920, 0.0
        %v923 = vld [vmem:[%s9] sm:$0xff]
        %v924 = vld [vmem:[%s9 + $0x8] sm:$0xff]
        %v925 = vld [vmem:[%s9 + $0x10] sm:$0xff]
        %v926 = vld [vmem:[%s9 + $0x18] sm:$0xff]
        %v927 = vld [vmem:[%s9 + $0x20] sm:$0xff]
        %v928 = vld [vmem:[%s9 + $0x28] sm:$0xff]
        %v929 = vld [vmem:[%s9 + $0x30] sm:$0xff]
        %v930 = vld [vmem:[%s9 + $0x38] sm:$0xff]
        %v931 = vld [vmem:[%s9 + $0x40] sm:$0xff]
        %v932 = vld [vmem:[%s9 + $0x48] sm:$0xff]
        %v933 = vld [vmem:[%s9 + $0x50] sm:$0xf]
        %v934 = vld [vmem:[%s10] sm:$0x1]
        %vm935 = vcmask 687104
        %v937 = vsel %vm935, %v922, 0
        %vm939 = vcmask 1043456
        %v941 = vsel %vm939, %v933, 0
        %943 = vmatpush.msra.mxu0 0.0
        %944 = vmatpush.msra.mxu0 0.0
        %945 = vmatpush.msra.mxu0 0.0
        %946 = vmatpush.msra.mxu0 0.0
        %947 = vmatpush.msra.mxu0 0.0
        %948 = vmatpush.msra.mxu0 %v941
        %949 = vmatpush.msra.mxu0 %v932
        %950 = vmatpush.msra.mxu0 %v931
        %951 = vmatpush.msra.mxu0 %v930
        %952 = vmatpush.msra.mxu0 %v929
        %953 = vmatpush.msra.mxu0 %v928
        %954 = vmatpush.msra.mxu0 %v927
        %955 = vmatpush.msra.mxu0 %v926
        %956 = vmatpush.msra.mxu0 %v925
        %957 = vmatpush.msra.mxu0 %v924
        %958 = vmatpush.msra.mxu0 %v923
        %959 = vmatmul.f32.gmra.mxu0 %v937
        %v960 = vpop.f32.mrf.mxu0
        %v961 = vadd.f32 %v934, %v960
        %962 = vdwg.mxu0
        %963 = vst [vmem:[%s378] sm:$0x1] %v961
        %s964 = sand.u32 %s269, 1
        %s965 = scalar_lea.sflag [#allocation3], %s964
        %s966 = sand.u32 %s269, 1
        %s967 = scalar_lea.vmem [#allocation2], %s966
        // Predicated region
        $region65: #{net_forward.1} parent=63 // pred_check
          %p968 = pneg %p279
        $region66: #{net_forward.1} parent=63 // pred_check_branch
          %970 = sbr.rel (%p968) target = $region68
        $region67: #{net_forward.1} parent=63 // pred_region
          %972 = vsyncadd %s965, 0
          %s973 = scalar_lea.hbm %s11, %s25
          %s975 = sshll.u32 %s967, 4
          %s976 = int_to_ptr.vmem [resolvable:$true] %s975
          %s977 = sshll.u32 %s973, 4
          %s978 = int_to_ptr.hbm [resolvable:$true] %s977
          %980 = dma.vmem_to_hbm [thread:$0]  %s976, 16, %s978, %s965
        $region68: #{net_forward.1} parent=63 // pred_fallthru
          _
      $region64: #{net_forward.1} parent=5 // pred_fallthru
        _
      %p981 = scmp.le.s32.totalorder 2, %s20
      // Predicated region
      $region69: #{net_forward.1} parent=5 // pred_check
        %p982 = pneg %p981
      $region70: #{net_forward.1} parent=5 // pred_check_branch
        %984 = sbr.rel (%p982) target = $region72
      $region71: #{net_forward.1} parent=5 // pred_region
        %s985 = ssub.s32 %s20, 2
        // Predicated region
        $region73: #{net_forward.1} parent=71 // pred_check
          %p986 = pneg %p285
        $region74: #{net_forward.1} parent=71 // pred_check_branch
          %988 = sbr.rel (%p986) target = $region76
        $region75: #{net_forward.1} parent=71 // pred_region
          %s989 = sand.u32 %s270, 1
          %s990 = scalar_lea.sflag [#allocation3], %s989
          %s991 = sand.u32 %s270, 1
          %s992 = scalar_lea.vmem [#allocation2], %s991
          %994 = dma.done %s990, 16
        $region76: #{net_forward.1} parent=71 // pred_fallthru
          _
      $region72: #{net_forward.1} parent=5 // pred_fallthru
        _
    $region6: #{net_forward.1} parent=1 // loop_footer
      %s24 = sadd.s32 1, %s20
    $region7: #{net_forward.1} parent=1 // loop_footer_branch
      %19 = sbr.rel target = $region3
    $region8: #{net_forward.1} parent=1 // loop_exit
      _
    %995 = vsyncpa [#allocation3], 1
    %s996 = scalar_lea.sflag [#allocation3], 1
    %997 = vsyncpa %s996, 1

</llo_original>
